<compile_context>
chip_gen: v6e
topology: v6e:2x2x1
jax: 0.10.0
libtpu: 0.0.40
codegen_flags: <defaults>
</compile_context>

<pallas_src>
import functools

import jax
import jax.numpy as jnp
from jax.experimental import pallas as pl
from jax.experimental.pallas import tpu as pltpu

LN_EPS = 1e-5  # nn.LayerNorm default
_MIB = 1024 * 1024
# Keep the per-call working set comfortably inside v7x's 64 MiB physical VMEM
# per TensorCore (v5e/v6e have 128 MiB, so this is conservative there).
_VMEM_BUDGET = 40 * _MIB


def _round_up(x, m):
    return -(-x // m) * m


# --------------------------- kernels ---------------------------------------


def _block_kernel_resident(*refs, has_residual):
    """Fused add + LayerNorm + Linear mixer; whole weight resident in VMEM.

    LayerNorm affine is folded into the mixer weight/bias by the wrapper, so
    the kernel only normalizes.  LN result stays in vregs (no scratch)."""
    if has_residual:
        h_ref, r_ref, w_ref, b_ref, out_h_ref, out_r_ref = refs
    else:
        h_ref, w_ref, b_ref, out_h_ref, out_r_ref = refs
        r_ref = None

    h = h_ref[...].astype(jnp.float32)
    res = h if r_ref is None else h + r_ref[...].astype(jnp.float32)
    out_r_ref[...] = res.astype(out_r_ref.dtype)          # residual_in_fp32 path

    mean = jnp.mean(res, axis=-1, keepdims=True)
    cent = res - mean
    var = jnp.mean(cent * cent, axis=-1, keepdims=True)
    normed = (cent * jax.lax.rsqrt(var + LN_EPS)).astype(jnp.bfloat16)

    acc = jnp.dot(normed, w_ref[...], preferred_element_type=jnp.float32)
    out_h_ref[...] = (acc + b_ref[...].astype(jnp.float32)).astype(out_h_ref.dtype)


def _block_kernel_streamed(*refs, has_residual):
    """Fallback for very large D: mixer weight streamed in (D, tn) column
    tiles; LN result cached in a VMEM scratch across the column axis."""
    if has_residual:
        h_ref, r_ref, w_ref, b_ref, out_h_ref, out_r_ref, normed_ref = refs
    else:
        h_ref, w_ref, b_ref, out_h_ref, out_r_ref, normed_ref = refs
        r_ref = None

    @pl.when(pl.program_id(1) == 0)
    def _():
        h = h_ref[...].astype(jnp.float32)
        res = h if r_ref is None else h + r_ref[...].astype(jnp.float32)
        out_r_ref[...] = res.astype(out_r_ref.dtype)
        mean = jnp.mean(res, axis=-1, keepdims=True)
        cent = res - mean
        var = jnp.mean(cent * cent, axis=-1, keepdims=True)
        normed_ref[...] = (cent * jax.lax.rsqrt(var + LN_EPS)).astype(normed_ref.dtype)

    acc = jnp.dot(normed_ref[...], w_ref[...], preferred_element_type=jnp.float32)
    out_h_ref[...] = (acc + b_ref[...].astype(jnp.float32)).astype(out_h_ref.dtype)


# --------------------------- tiling ----------------------------------------


def _pick_col_tile(D, max_tile):
    """Largest multiple of 128 that divides D and is <= max_tile (else D)."""
    if D <= max_tile:
        return D
    for t in range(max_tile, 0, -128):
        if D % t == 0:
            return t
    return D


def _footprint_bytes(tm, D, tn, resident, h_by, r_by, oh_by, or_by):
    act = 2 * tm * D * (h_by + oh_by + or_by)      # double-buffered activation tiles
    if r_by:
        act += 2 * tm * D * r_by
    if resident:
        wgt = 2 * D * D * 2 + 2 * D * 4            # bf16 weight (2 bufs) + fp32 bias
        scratch = 0
    else:
        wgt = 2 * D * tn * 2 + 2 * tn * 4
        scratch = tm * D * 2                       # bf16 LN cache
    return act + wgt + scratch


def _choose_tiling(N, D, row_tile, col_tile, weight_resident,
                   h_by, r_by, oh_by, or_by):
    tn = _pick_col_tile(D, col_tile)

    # Initial row tile: requested, but keep >= 2 row blocks when possible so
    # both v7x TensorCores get work on the "parallel" axis.
    tm = max(8, (min(int(row_tile), _round_up(N, 8)) // 8) * 8)
    if N >= 16:
        tm = min(tm, _round_up(-(-N // 2), 8))
    if N < 8:
        tm = N

    modes = [weight_resident] if weight_resident is not None else [True, False]
    t = tm
    for resident in modes:
        t = tm
        while (_footprint_bytes(t, D, tn, resident, h_by, r_by, oh_by, or_by)
               > _VMEM_BUDGET and t > 8):
            t = max(8, _round_up(t // 2, 8))
        fp = _footprint_bytes(t, D, tn, resident, h_by, r_by, oh_by, or_by)
        if fp <= _VMEM_BUDGET:
            return t, tn, resident, fp
    # Last resort: smallest tiles, streamed weight.
    t = 8 if N >= 8 else N
    return t, tn, False, _footprint_bytes(t, D, tn, False, h_by, r_by, oh_by, or_by)


# --------------------------- wrapper ----------------------------------------


def block_forward(hidden_states, residual, ln_w, ln_b, mix_w, mix_b,
                  *, row_tile=512, col_tile=512, weight_resident=None,
                  residual_out_dtype=jnp.float32):
    """Mamba Block forward (eval).

    hidden_states: (B, L, D); residual: (B, L, D) or None (first block).
    residual_out_dtype=jnp.float32 preserves residual_in_fp32 semantics; set to
    bf16 to halve the residual-stream HBM traffic (relaxed semantics)."""
    B, L, D = hidden_states.shape
    assert D % 128 == 0, "embed dim must be a multiple of 128 (lane-dense stores)"
    out_dtype = hidden_states.dtype
    N = B * L

    has_residual = residual is not None
    h2 = hidden_states.reshape(N, D)                      # no host-side padding
    r2 = residual.reshape(N, D) if has_residual else None  # native dtype, cast in-kernel

    # Fold LayerNorm affine into the mixer:
    #   (norm(x) * g + b) @ W + c == norm(x) @ (g[:,None] * W) + (b @ W + c)
    w32 = mix_w.astype(jnp.float32)
    w_folded = (ln_w.astype(jnp.float32)[:, None] * w32).astype(jnp.bfloat16)
    b_folded = (ln_b.astype(jnp.float32) @ w32
                + mix_b.astype(jnp.float32)).reshape(1, D)

    h_by = jnp.dtype(h2.dtype).itemsize
    r_by = jnp.dtype(r2.dtype).itemsize if has_residual else 0
    oh_by = jnp.dtype(out_dtype).itemsize
    or_by = jnp.dtype(residual_out_dtype).itemsize

    tm, tn, resident, footprint = _choose_tiling(
        N, D, row_tile, col_tile, weight_resident, h_by, r_by, oh_by, or_by)

    n_row_blocks = pl.cdiv(N, tm)          # ragged last tile masked by Pallas
    vmem_limit = int(min(max(footprint + 4 * _MIB, 32 * _MIB), 48 * _MIB))

    out_shape = (
        jax.ShapeDtypeStruct((N, D), out_dtype),
        jax.ShapeDtypeStruct((N, D), residual_out_dtype),
    )

    if resident:
        grid = (n_row_blocks,)
        row_spec = pl.BlockSpec((tm, D), lambda i: (i, 0))
        in_specs = [row_spec] + ([row_spec] if has_residual else []) + [
            pl.BlockSpec((D, D), lambda i: (0, 0)),   # constant index: DMA'd once
            pl.BlockSpec((1, D), lambda i: (0, 0)),
        ]
        out_specs = [row_spec, row_spec]
        scratch = []
        kernel = functools.partial(_block_kernel_resident, has_residual=has_residual)
        dims = ("parallel",)
    else:
        grid = (n_row_blocks, D // tn)
        row_spec = pl.BlockSpec((tm, D), lambda i, j: (i, 0))
        in_specs = [row_spec] + ([row_spec] if has_residual else []) + [
            # TODO(synk): optional pipeline_mode=pl.Buffered(3) on this weight
            # stream; skipped since the resident-weight path covers typical D.
            pl.BlockSpec((D, tn), lambda i, j: (0, j)),
            pl.BlockSpec((1, tn), lambda i, j: (0, j)),
        ]
        out_specs = [pl.BlockSpec((tm, tn), lambda i, j: (i, j)), row_spec]
        scratch = [pltpu.VMEM((tm, D), jnp.bfloat16)]   # cached LN output
        kernel = functools.partial(_block_kernel_streamed, has_residual=has_residual)
        dims = ("parallel", "arbitrary")

    args = [h2] + ([r2] if has_residual else []) + [w_folded, b_folded]

    out_h, out_r = pl.pallas_call(
        kernel,
        out_shape=out_shape,
        grid_spec=pltpu.PrefetchScalarGridSpec(
            num_scalar_prefetch=0,
            grid=grid,
            in_specs=in_specs,
            out_specs=out_specs,
            scratch_shapes=scratch,
        ),
        compiler_params=pltpu.CompilerParams(
            dimension_semantics=dims,
            vmem_limit_bytes=vmem_limit,
        ),
    )(*args)

    return out_h.reshape(B, L, D), out_r.reshape(B, L, D)


# --------------------------- reference & test --------------------------------


def _reference(hidden_states, residual, ln_w, ln_b, mix_w, mix_b):
    h = hidden_states.astype(jnp.float32)
    r = h if residual is None else residual.astype(jnp.float32) + h
    mean = jnp.mean(r, axis=-1, keepdims=True)
    var = jnp.mean((r - mean) ** 2, axis=-1, keepdims=True)
    n = (r - mean) / jnp.sqrt(var + LN_EPS) * ln_w + ln_b
    out = n @ mix_w + mix_b
    return out.astype(hidden_states.dtype), r


if __name__ == "__main__":
    B, L, D = 2, 136, 256   # small, lane-dense (D % 128 == 0), exercises ragged tiles
    key = jax.random.PRNGKey(0)
    k1, k2, k3, k4, k5, k6 = jax.random.split(key, 6)

    hidden = jax.random.normal(k1, (B, L, D), dtype=jnp.float32)
    residual = jax.random.normal(k2, (B, L, D), dtype=jnp.float32)

    # Deterministic parameter init (LayerNorm + Linear mixer).
    ln_w = jnp.ones((D,), jnp.float32) + 0.01 * jax.random.normal(k3, (D,), dtype=jnp.float32)
    ln_b = 0.01 * jax.random.normal(k4, (D,), dtype=jnp.float32)
    mix_w = jax.random.normal(k5, (D, D), dtype=jnp.float32) / jnp.sqrt(D)
    mix_b = 0.01 * jax.random.normal(k6, (D,), dtype=jnp.float32)

    ref_h, ref_r = _reference(hidden, residual, ln_w, ln_b, mix_w, mix_b)
    ref_h0, ref_r0 = _reference(hidden, None, ln_w, ln_b, mix_w, mix_b)

    # Case 1: defaults — resident-weight path, 2 row blocks, no host pad/slice.
    out_h, out_r = block_forward(hidden, residual, ln_w, ln_b, mix_w, mix_b)
    jax.block_until_ready((out_h, out_r))
    assert jnp.allclose(out_h, ref_h, atol=2e-2, rtol=2e-2)   # bf16 MXU path
    assert jnp.allclose(out_r, ref_r, atol=1e-5, rtol=1e-5)   # exact fp32 add

    # Case 2: first block (residual is None) -> dedicated kernel variant.
    out_h0, out_r0 = block_forward(hidden, None, ln_w, ln_b, mix_w, mix_b)
    jax.block_until_ready((out_h0, out_r0))
    assert jnp.allclose(out_h0, ref_h0, atol=2e-2, rtol=2e-2)
    assert jnp.allclose(out_r0, ref_r0, atol=1e-5, rtol=1e-5)

    # Case 3: ragged last row tile (N=272, tm=128 -> 3 blocks, 16 valid rows last).
    out_h1, out_r1 = block_forward(hidden, residual, ln_w, ln_b, mix_w, mix_b,
                                   row_tile=128)
    jax.block_until_ready((out_h1, out_r1))
    assert jnp.allclose(out_h1, ref_h, atol=2e-2, rtol=2e-2)
    assert jnp.allclose(out_r1, ref_r, atol=1e-5, rtol=1e-5)

    # Case 4: forced streamed-weight fallback (column-tiled grid + LN scratch).
    out_h2, out_r2 = block_forward(hidden, residual, ln_w, ln_b, mix_w, mix_b,
                                   row_tile=128, col_tile=128, weight_resident=False)
    jax.block_until_ready((out_h2, out_r2))
    assert jnp.allclose(out_h2, ref_h, atol=2e-2, rtol=2e-2)
    assert jnp.allclose(out_r2, ref_r, atol=1e-5, rtol=1e-5)

    # Case 5: optional bf16 residual carry (relaxed residual_in_fp32 semantics).
    out_h3, out_r3 = block_forward(hidden, residual, ln_w, ln_b, mix_w, mix_b,
                                   residual_out_dtype=jnp.bfloat16)
    jax.block_until_ready((out_h3, out_r3))
    assert jnp.allclose(out_h3, ref_h, atol=2e-2, rtol=2e-2)
    assert jnp.allclose(out_r3.astype(jnp.float32), ref_r, atol=2e-2, rtol=1e-2)

    print("KERNEL_OK")
</pallas_src>

<mosaic_0001>
module attributes {stable_mosaic.version = 11 : i64} {
  func.func @_block_kernel_resident(%arg0: i32, %arg1: memref<136x256xf32, #tpu.memory_space<vmem>>, %arg2: memref<136x256xf32, #tpu.memory_space<vmem>>, %arg3: memref<256x256xbf16, #tpu.memory_space<vmem>>, %arg4: memref<1x256xf32, #tpu.memory_space<vmem>>, %arg5: memref<136x256xf32, #tpu.memory_space<vmem>>, %arg6: memref<136x256xf32, #tpu.memory_space<vmem>>) attributes {dimension_semantics = [#tpu.dimension_semantics<parallel>], iteration_bounds = array<i64: 2>, scalar_prefetch = 0 : i64, scratch_operands = 0 : i64, tpu.core_type = #tpu.core_type<tc>, window_params = [{transform_indices = @transform_0, window_bounds = array<i64: 136, 256>}, {transform_indices = @transform_1, window_bounds = array<i64: 136, 256>}, {pipeline_mode = #tpu.pipeline_mode<synchronous>, transform_indices = @transform_2, window_bounds = array<i64: 256, 256>}, {pipeline_mode = #tpu.pipeline_mode<synchronous>, transform_indices = @transform_3, window_bounds = array<i64: 1, 256>}, {transform_indices = @transform_4, window_bounds = array<i64: 136, 256>}, {transform_indices = @transform_5, window_bounds = array<i64: 136, 256>}]} {
    %c0 = arith.constant 0 : index
    %c0_0 = arith.constant 0 : index
    %0 = vector.load %arg1[%c0, %c0_0] : memref<136x256xf32, #tpu.memory_space<vmem>>, vector<136x256xf32>
    %c0_1 = arith.constant 0 : index
    %c0_2 = arith.constant 0 : index
    %1 = vector.load %arg2[%c0_1, %c0_2] : memref<136x256xf32, #tpu.memory_space<vmem>>, vector<136x256xf32>
    %2 = arith.addf %0, %1 : vector<136x256xf32>
    %c0_3 = arith.constant 0 : index
    %c0_4 = arith.constant 0 : index
    %3 = vector.load %arg6[%c0_3, %c0_4] : memref<136x256xf32, #tpu.memory_space<vmem>>, vector<136x256xf32>
    tpu.vector_store %arg6[%c0_3, %c0_4], %2 {strides = array<i32>} : memref<136x256xf32, #tpu.memory_space<vmem>>, vector<136x256xf32>,
    %cst = arith.constant dense<0.000000e+00> : vector<136xf32>
    %4 = vector.multi_reduction <add>, %2, %cst [1] : vector<136x256xf32> to vector<136xf32>
    %5 = vector.shape_cast %4 : vector<136xf32> to vector<136x1xf32>
    %cst_5 = arith.constant 2.560000e+02 : f32
    %6 = vector.broadcast %cst_5 : f32 to vector<136x1xf32>
    %7 = arith.divf %5, %6 : vector<136x1xf32>
    %8 = vector.broadcast %7 : vector<136x1xf32> to vector<136x256xf32>
    %9 = arith.subf %2, %8 : vector<136x256xf32>
    %10 = arith.mulf %9, %9 : vector<136x256xf32>
    %cst_6 = arith.constant dense<0.000000e+00> : vector<136xf32>
    %11 = vector.multi_reduction <add>, %10, %cst_6 [1] : vector<136x256xf32> to vector<136xf32>
    %12 = vector.shape_cast %11 : vector<136xf32> to vector<136x1xf32>
    %cst_7 = arith.constant 2.560000e+02 : f32
    %13 = vector.broadcast %cst_7 : f32 to vector<136x1xf32>
    %14 = arith.divf %12, %13 : vector<136x1xf32>
    %cst_8 = arith.constant 9.99999974E-6 : f32
    %15 = vector.broadcast %cst_8 : f32 to vector<136x1xf32>
    %16 = arith.addf %14, %15 : vector<136x1xf32>
    %17 = math.rsqrt %16 : vector<136x1xf32>
    %18 = vector.broadcast %17 : vector<136x1xf32> to vector<136x256xf32>
    %19 = arith.mulf %9, %18 : vector<136x256xf32>
    %20 = arith.truncf %19 : vector<136x256xf32> to vector<136x256xbf16>
    %c0_9 = arith.constant 0 : index
    %c0_10 = arith.constant 0 : index
    %21 = vector.load %arg3[%c0_9, %c0_10] : memref<256x256xbf16, #tpu.memory_space<vmem>>, vector<256x256xbf16>
    %cst_11 = arith.constant dense<0.000000e+00> : vector<136x256xf32>
    %22 = tpu.matmul %20, %21, %cst_11 {dimension_numbers = #tpu.dot_dimension_numbers<[1], [0], [0], [1], [0, 0, 1, 1], [], []>} : vector<136x256xbf16>, vector<256x256xbf16>, vector<136x256xf32> -> vector<136x256xf32>
    %c0_12 = arith.constant 0 : index
    %c0_13 = arith.constant 0 : index
    %23 = vector.load %arg4[%c0_12, %c0_13] : memref<1x256xf32, #tpu.memory_space<vmem>>, vector<1x256xf32>
    %24 = vector.broadcast %23 : vector<1x256xf32> to vector<136x256xf32>
    %25 = arith.addf %22, %24 : vector<136x256xf32>
    %c0_14 = arith.constant 0 : index
    %c0_15 = arith.constant 0 : index
    %26 = vector.load %arg5[%c0_14, %c0_15] : memref<136x256xf32, #tpu.memory_space<vmem>>, vector<136x256xf32>
    tpu.vector_store %arg5[%c0_14, %c0_15], %25 {strides = array<i32>} : memref<136x256xf32, #tpu.memory_space<vmem>>, vector<136x256xf32>,
    return
  }
  func.func @transform_0(%arg0: i32) -> (i32, i32) {
    %c0_i32 = arith.constant 0 : i32
    %c0_i32_0 = arith.constant 0 : i32
    return %arg0, %c0_i32 : i32, i32
  }
  func.func @transform_1(%arg0: i32) -> (i32, i32) {
    %c0_i32 = arith.constant 0 : i32
    %c0_i32_0 = arith.constant 0 : i32
    return %arg0, %c0_i32 : i32, i32
  }
  func.func @transform_2(%arg0: i32) -> (i32, i32) {
    %c0_i32 = arith.constant 0 : i32
    %c0_i32_0 = arith.constant 0 : i32
    %c0_i32_1 = arith.constant 0 : i32
    return %c0_i32, %c0_i32_0 : i32, i32
  }
  func.func @transform_3(%arg0: i32) -> (i32, i32) {
    %c0_i32 = arith.constant 0 : i32
    %c0_i32_0 = arith.constant 0 : i32
    %c0_i32_1 = arith.constant 0 : i32
    return %c0_i32, %c0_i32_0 : i32, i32
  }
  func.func @transform_4(%arg0: i32) -> (i32, i32) {
    %c0_i32 = arith.constant 0 : i32
    %c0_i32_0 = arith.constant 0 : i32
    return %arg0, %c0_i32 : i32, i32
  }
  func.func @transform_5(%arg0: i32) -> (i32, i32) {
    %c0_i32 = arith.constant 0 : i32
    %c0_i32_0 = arith.constant 0 : i32
    return %arg0, %c0_i32 : i32, i32
  }
}

</mosaic_0001>

<llo_original>
// kernel: tpu_custom_call.1
$region0: #{tpu_custom_call.1}
  #allocation0 [shape = 'u32[]', space=smem, size = 0x4, offset = 0x4, fixed_abs, tag = 'smem constant byte address 0x4 - core index']
  #allocation1 [shape = 'u32[144,128]{1,0:T(1,128)}', space=vmem, size = 0x12000, scoped, tag = 'internal scratch']
  %s0 = inlined_call_operand.hbm [shape: f32[272,256], index: 0, kind: input, shape index: {}]
  %s1 = inlined_call_operand.hbm [shape: f32[272,256], index: 1, kind: input, shape index: {}]
  %s2 = inlined_call_operand.hbm [shape: bf16[256,256], index: 2, kind: input, shape index: {}]
  %s3 = inlined_call_operand.vmem [shape: f32[1,256], index: 3, kind: input, shape index: {}]
  %s4 = inlined_call_operand.hbm [shape: f32[272,256], index: 4, kind: output, shape index: {0}]
  %s5 = inlined_call_operand.hbm [shape: f32[272,256], index: 5, kind: output, shape index: {1}]
  %6 = xla_tuple %s4, %s5
  %s7 = sld [smem:[#allocation0]]
  $region69: #{tpu_custom_call.1} parent=0
    _
  %s9 = ssub.s32 1, %s7
  %s10 = scalar_select 0, %s9, %s7
  $region1: #{tpu_custom_call.1} parent=0
    #allocation2 [shape = 'u8[278528]{0}', space=vmem, size = 0x44000, scoped, tag = 'input window, operand 0']
    #allocation3 [shape = 's32[2]{0}', space=sflag, size = 0x8, scoped, tag = 'scoped memory for tpu_custom_call.1']
    #allocation4 [shape = 's32[2]{0}', space=sflag, size = 0x8, scoped, tag = 'scoped memory for tpu_custom_call.1']
    #allocation5 [shape = 'u8[278528]{0}', space=vmem, size = 0x44000, scoped, tag = 'input window, operand 1']
    #allocation6 [shape = 's32[2]{0}', space=sflag, size = 0x8, scoped, tag = 'scoped memory for tpu_custom_call.1']
    #allocation7 [shape = 'u8[131072]{0}', space=vmem, size = 0x20000, scoped, tag = 'input window, operand 2, single buffered']
    #allocation8 [shape = 'u8[278528]{0}', space=vmem, size = 0x44000, scoped, tag = 'output window, operand 0']
    #allocation9 [shape = 'u8[278528]{0}', space=vmem, size = 0x44000, scoped, tag = 'output window, operand 1']
    #allocation10 [shape = 's32[2]{0}', space=sflag, size = 0x8, scoped, tag = 'scoped memory for tpu_custom_call.1']
    %11 = vsyncpa [#allocation3], 0
    %s12 = scalar_lea.sflag [#allocation3], 1
    %13 = vsyncpa %s12, 0
    %14 = vsyncpa [#allocation6], 0
    %s15 = scalar_lea.sflag [#allocation6], 1
    %16 = vsyncpa %s15, 0
    %17 = vsyncpa [#allocation4], 0
    %s18 = scalar_lea.sflag [#allocation4], 1
    %19 = vsyncpa %s18, 0
    %20 = vsyncpa [#allocation10], 0
    %s21 = scalar_lea.sflag [#allocation10], 1
    %22 = vsyncpa %s21, 0
    loop: start=0, step=1, limit=4
    $region2: #{tpu_custom_call.1} parent=1 // loop_pre_header
      _
    $region3: #{tpu_custom_call.1} parent=1 // loop_header
      %s24 = sphi 0, %s28
      %p25 = scmp.ge.s32.totalorder %s24, 4
      %s34 = sphi 0, %s36
      %s37 = sphi 0, %s34
      %s38 = sphi 0, %s37
      %s54 = sphi 0, %s38
      %s60 = sphi 0, %s62
      %s63 = sphi 0, %s60
      %s64 = sphi 0, %s63
      %s80 = sphi 0, %s64
      %s84 = sphi 0, %s84
      %s86 = sphi 0, %s84
      %s87 = sphi 0, %s86
      %s101 = sphi 0, %s87
      %s105 = sphi 0, %s105
      %s107 = sphi 0, %s105
      %s108 = sphi 0, %s107
      %s122 = sphi 0, %s108
      %s128 = sphi 0, %s130
      %s131 = sphi 0, %s128
      %s132 = sphi 0, %s131
      %s148 = sphi 0, %s132
      %s154 = sphi 0, %s156
      %s157 = sphi 0, %s154
      %s158 = sphi 0, %s157
      %s174 = sphi 0, %s158
    $region4: #{tpu_custom_call.1} parent=1 // loop_header_branch
      %27 = sbr.rel (%p25) target = $region8
    $region5: #{tpu_custom_call.1} parent=1 // loop_body
      %s29 = ssub.s32 %s24, 1
      %s30 = ssub.s32 %s24, 2
      %s31 = sadd.s32 %s24, 1
      %s32 = ssub.s32 %s24, %s31
      %p33 = scmp.eq.s32.totalorder %s32, 0
      %s35 = sadd.s32 %s34, 1
      %s36 = scalar_select %p33, %s34, %s35
      %p39 = pneg %p33
      %p40 = scmp.eq.s32.totalorder %s24, 1
      %p41 = por %p39, %p40
      %p42 = scmp.ne.s32.totalorder %s34, %s37
      %p43 = scmp.eq.s32.totalorder %s24, 0
      %p44 = por %p42, %p43
      %p45 = scmp.ne.s32.totalorder %s34, %s37
      %p46 = scmp.eq.s32.totalorder %s29, 1
      %p47 = por %p45, %p46
      %p48 = scmp.ne.s32.totalorder %s37, %s38
      %p49 = scmp.eq.s32.totalorder %s29, 0
      %p50 = por %p48, %p49
      %p51 = scmp.ne.s32.totalorder %s37, %s38
      %p52 = scmp.eq.s32.totalorder %s30, 1
      %p53 = por %p51, %p52
      %p55 = scmp.ne.s32.totalorder %s38, %s54
      %p56 = scmp.eq.s32.totalorder %s30, 0
      %p57 = por %p55, %p56
      %s58 = ssub.s32 %s24, %s31
      %p59 = scmp.eq.s32.totalorder %s58, 0
      %s61 = sadd.s32 %s60, 1
      %s62 = scalar_select %p59, %s60, %s61
      %p65 = pneg %p59
      %p66 = scmp.eq.s32.totalorder %s24, 1
      %p67 = por %p65, %p66
      %p68 = scmp.ne.s32.totalorder %s60, %s63
      %p69 = scmp.eq.s32.totalorder %s24, 0
      %p70 = por %p68, %p69
      %p71 = scmp.ne.s32.totalorder %s60, %s63
      %p72 = scmp.eq.s32.totalorder %s29, 1
      %p73 = por %p71, %p72
      %p74 = scmp.ne.s32.totalorder %s63, %s64
      %p75 = scmp.eq.s32.totalorder %s29, 0
      %p76 = por %p74, %p75
      %p77 = scmp.ne.s32.totalorder %s63, %s64
      %p78 = scmp.eq.s32.totalorder %s30, 1
      %p79 = por %p77, %p78
      %p81 = scmp.ne.s32.totalorder %s64, %s80
      %p82 = scmp.eq.s32.totalorder %s30, 0
      %p83 = por %p81, %p82
      %s85 = sadd.s32 %s84, 1
      %p88 = scmp.eq.s32.totalorder %s24, 1
      %p89 = scmp.ne.s32.totalorder %s84, %s86
      %p90 = scmp.eq.s32.totalorder %s24, 0
      %p91 = por %p89, %p90
      %p92 = scmp.ne.s32.totalorder %s84, %s86
      %p93 = scmp.eq.s32.totalorder %s29, 1
      %p94 = por %p92, %p93
      %p95 = scmp.ne.s32.totalorder %s86, %s87
      %p96 = scmp.eq.s32.totalorder %s29, 0
      %p97 = por %p95, %p96
      %p98 = scmp.ne.s32.totalorder %s86, %s87
      %p99 = scmp.eq.s32.totalorder %s30, 1
      %p100 = por %p98, %p99
      %p102 = scmp.ne.s32.totalorder %s87, %s101
      %p103 = scmp.eq.s32.totalorder %s30, 0
      %p104 = por %p102, %p103
      %s106 = sadd.s32 %s105, 1
      %p109 = scmp.eq.s32.totalorder %s24, 1
      %p110 = scmp.ne.s32.totalorder %s105, %s107
      %p111 = scmp.eq.s32.totalorder %s24, 0
      %p112 = por %p110, %p111
      %p113 = scmp.ne.s32.totalorder %s105, %s107
      %p114 = scmp.eq.s32.totalorder %s29, 1
      %p115 = por %p113, %p114
      %p116 = scmp.ne.s32.totalorder %s107, %s108
      %p117 = scmp.eq.s32.totalorder %s29, 0
      %p118 = por %p116, %p117
      %p119 = scmp.ne.s32.totalorder %s107, %s108
      %p120 = scmp.eq.s32.totalorder %s30, 1
      %p121 = por %p119, %p120
      %p123 = scmp.ne.s32.totalorder %s108, %s122
      %p124 = scmp.eq.s32.totalorder %s30, 0
      %p125 = por %p123, %p124
      %s126 = ssub.s32 %s24, %s31
      %p127 = scmp.eq.s32.totalorder %s126, 0
      %s129 = sadd.s32 %s128, 1
      %s130 = scalar_select %p127, %s128, %s129
      %p133 = pneg %p127
      %p134 = scmp.eq.s32.totalorder %s24, 1
      %p135 = por %p133, %p134
      %p136 = scmp.ne.s32.totalorder %s128, %s131
      %p137 = scmp.eq.s32.totalorder %s24, 0
      %p138 = por %p136, %p137
      %p139 = scmp.ne.s32.totalorder %s128, %s131
      %p140 = scmp.eq.s32.totalorder %s29, 1
      %p141 = por %p139, %p140
      %p142 = scmp.ne.s32.totalorder %s131, %s132
      %p143 = scmp.eq.s32.totalorder %s29, 0
      %p144 = por %p142, %p143
      %p145 = scmp.ne.s32.totalorder %s131, %s132
      %p146 = scmp.eq.s32.totalorder %s30, 1
      %p147 = por %p145, %p146
      %p149 = scmp.ne.s32.totalorder %s132, %s148
      %p150 = scmp.eq.s32.totalorder %s30, 0
      %p151 = por %p149, %p150
      %s152 = ssub.s32 %s24, %s31
      %p153 = scmp.eq.s32.totalorder %s152, 0
      %s155 = sadd.s32 %s154, 1
      %s156 = scalar_select %p153, %s154, %s155
      %p159 = pneg %p153
      %p160 = scmp.eq.s32.totalorder %s24, 1
      %p161 = por %p159, %p160
      %p162 = scmp.ne.s32.totalorder %s154, %s157
      %p163 = scmp.eq.s32.totalorder %s24, 0
      %p164 = por %p162, %p163
      %p165 = scmp.ne.s32.totalorder %s154, %s157
      %p166 = scmp.eq.s32.totalorder %s29, 1
      %p167 = por %p165, %p166
      %p168 = scmp.ne.s32.totalorder %s157, %s158
      %p169 = scmp.eq.s32.totalorder %s29, 0
      %p170 = por %p168, %p169
      %p171 = scmp.ne.s32.totalorder %s157, %s158
      %p172 = scmp.eq.s32.totalorder %s30, 1
      %p173 = por %p171, %p172
      %p175 = scmp.ne.s32.totalorder %s158, %s174
      %p176 = scmp.eq.s32.totalorder %s30, 0
      %p177 = por %p175, %p176
      %p178 = scmp.le.s32.totalorder 1, %s24
      %p179 = scmp.lt.s32.totalorder %s24, 3
      %p180 = pnand %p178, %p179
      %p181 = pneg %p180
      // Predicated region
      $region9: #{tpu_custom_call.1} parent=5 // pred_check
        _
      $region10: #{tpu_custom_call.1} parent=5 // pred_check_branch
        %183 = sbr.rel (%p180) target = $region12
      $region11: #{tpu_custom_call.1} parent=5 // pred_region
        %s184 = ssub.s32 %s24, 1
        // Predicated region
        $region13: #{tpu_custom_call.1} parent=11 // pred_check
          %p185 = pneg %p97
        $region14: #{tpu_custom_call.1} parent=11 // pred_check_branch
          %187 = sbr.rel (%p185) target = $region16
        $region15: #{tpu_custom_call.1} parent=11 // pred_region
          %s189 = ssub.s32 4096, 4096
          %190 = vsyncadd [#allocation6], %s189
          %s191 = sshll.u32 [#allocation7], 4
          %s192 = int_to_ptr.vmem [resolvable:$true] %s191
          %197 = dma.hbm_to_vmem [thread:$0]  %s2, 4096, %s192, [#allocation6], 128, 128, 8
        $region16: #{tpu_custom_call.1} parent=11 // pred_fallthru
          _
        // Predicated region
        $region17: #{tpu_custom_call.1} parent=11 // pred_check
          %p198 = pneg %p118
        $region18: #{tpu_custom_call.1} parent=11 // pred_check_branch
          %200 = sbr.rel (%p198) target = $region20
        $region19: #{tpu_custom_call.1} parent=11 // pred_region
          _
        $region20: #{tpu_custom_call.1} parent=11 // pred_fallthru
          _
      $region12: #{tpu_custom_call.1} parent=5 // pred_fallthru
        _
      %p201 = scmp.lt.s32.totalorder %s24, 2
      // Predicated region
      $region21: #{tpu_custom_call.1} parent=5 // pred_check
        %p202 = pneg %p201
      $region22: #{tpu_custom_call.1} parent=5 // pred_check_branch
        %204 = sbr.rel (%p202) target = $region24
      $region23: #{tpu_custom_call.1} parent=5 // pred_region
        // Predicated region
        $region25: #{tpu_custom_call.1} parent=23 // pred_check
          %p205 = pneg %p44
        $region26: #{tpu_custom_call.1} parent=23 // pred_check_branch
          %207 = sbr.rel (%p205) target = $region28
        $region27: #{tpu_custom_call.1} parent=23 // pred_region
          %s208 = sand.u32 %s34, 1
          %s209 = scalar_lea.sflag [#allocation3], %s208
          %s210 = sand.u32 %s34, 1
          %s211 = smul.addr %s210, 272
          %s212 = scalar_lea.vmem [#allocation2], %s211
          %s213 = smul.u32 17, %s24
          %s215 = ssub.s32 4352, 4352
          %216 = vsyncadd %s209, %s215
          %s217 = smul.addr %s213, 2
          %s218 = smul.addr %s217, 128
          %s219 = scalar_lea.hbm %s0, %s218
          %s220 = sshll.u32 %s212, 4
          %s221 = int_to_ptr.vmem [resolvable:$true] %s220
          %226 = dma.hbm_to_vmem [thread:$0]  %s219, 4352, %s221, %s209, 256, 256, 16
        $region28: #{tpu_custom_call.1} parent=23 // pred_fallthru
          _
        // Predicated region
        $region29: #{tpu_custom_call.1} parent=23 // pred_check
          %p227 = pneg %p70
        $region30: #{tpu_custom_call.1} parent=23 // pred_check_branch
          %229 = sbr.rel (%p227) target = $region32
        $region31: #{tpu_custom_call.1} parent=23 // pred_region
          %s230 = sand.u32 %s24, 1
          %s231 = scalar_lea.sflag [#allocation6], %s230
          %s232 = sand.u32 %s60, 1
          %s233 = smul.addr %s232, 272
          %s234 = scalar_lea.vmem [#allocation5], %s233
          %s235 = smul.u32 17, %s24
          %s237 = ssub.s32 4352, 4352
          %238 = vsyncadd %s231, %s237
          %s239 = smul.addr %s235, 2
          %s240 = smul.addr %s239, 128
          %s241 = scalar_lea.hbm %s1, %s240
          %s242 = sshll.u32 %s234, 4
          %s243 = int_to_ptr.vmem [resolvable:$true] %s242
          %248 = dma.hbm_to_vmem [thread:$0]  %s241, 4352, %s243, %s231, 256, 256, 16
        $region32: #{tpu_custom_call.1} parent=23 // pred_fallthru
          _
      $region24: #{tpu_custom_call.1} parent=5 // pred_fallthru
        _
      %p249 = scmp.le.s32.totalorder 1, %s24
      %p250 = scmp.lt.s32.totalorder %s24, 3
      %p251 = pnand %p249, %p250
      %p252 = pneg %p251
      // Predicated region
      $region33: #{tpu_custom_call.1} parent=5 // pred_check
        _
      $region34: #{tpu_custom_call.1} parent=5 // pred_check_branch
        %254 = sbr.rel (%p251) target = $region36
      $region35: #{tpu_custom_call.1} parent=5 // pred_region
        %s255 = ssub.s32 %s24, 1
        %s256 = sand.u32 %s37, 1
        %s257 = scalar_lea.sflag [#allocation3], %s256
        %s258 = sand.u32 %s37, 1
        %s259 = smul.addr %s258, 272
        %s260 = scalar_lea.vmem [#allocation2], %s259
        // Predicated region
        $region37: #{tpu_custom_call.1} parent=35 // pred_check
          %p261 = pneg %p50
        $region38: #{tpu_custom_call.1} parent=35 // pred_check_branch
          %263 = sbr.rel (%p261) target = $region40
        $region39: #{tpu_custom_call.1} parent=35 // pred_region
          %264 = dma.done %s257, 4352
        $region40: #{tpu_custom_call.1} parent=35 // pred_fallthru
          _
        %s265 = sand.u32 %s29, 1
        %s266 = scalar_lea.sflag [#allocation6], %s265
        %s267 = sand.u32 %s63, 1
        %s268 = smul.addr %s267, 272
        %s269 = scalar_lea.vmem [#allocation5], %s268
        // Predicated region
        $region41: #{tpu_custom_call.1} parent=35 // pred_check
          %p270 = pneg %p76
        $region42: #{tpu_custom_call.1} parent=35 // pred_check_branch
          %272 = sbr.rel (%p270) target = $region44
        $region43: #{tpu_custom_call.1} parent=35 // pred_region
          %273 = dma.done %s266, 4352
        $region44: #{tpu_custom_call.1} parent=35 // pred_fallthru
          _
        // Predicated region
        $region45: #{tpu_custom_call.1} parent=35 // pred_check
          %p274 = pneg %p97
        $region46: #{tpu_custom_call.1} parent=35 // pred_check_branch
          %276 = sbr.rel (%p274) target = $region48
        $region47: #{tpu_custom_call.1} parent=35 // pred_region
          %277 = dma.done [#allocation6], 4096
        $region48: #{tpu_custom_call.1} parent=35 // pred_fallthru
          _
        %s278 = sand.u32 %s37, 1
        %s279 = scalar_lea.sflag [#allocation3], %s278
        %s280 = sand.u32 %s37, 1
        %s281 = smul.addr %s280, 272
        %s282 = scalar_lea.vmem [#allocation2], %s281
        %p283 = pneg %p50
        %p284 = pneg %p47
        %s285 = sand.u32 %s29, 1
        %s286 = scalar_lea.sflag [#allocation6], %s285
        %s287 = sand.u32 %s63, 1
        %s288 = smul.addr %s287, 272
        %s289 = scalar_lea.vmem [#allocation5], %s288
        %p290 = pneg %p76
        %p291 = pneg %p73
        %p292 = pneg %p97
        %p293 = pneg %p94
        %p294 = pneg %p118
        %p295 = pneg %p115
        %p296 = pneg %p144
        %p297 = pneg %p141
        %s298 = sand.u32 %s131, 1
        %s299 = scalar_lea.sflag [#allocation4], %s298
        %s300 = sand.u32 %s131, 1
        %s301 = smul.addr %s300, 272
        %s302 = scalar_lea.vmem [#allocation8], %s301
        %p303 = pneg %p170
        %p304 = pneg %p167
        %s305 = sand.u32 %s157, 1
        %s306 = scalar_lea.sflag [#allocation10], %s305
        %s307 = sand.u32 %s157, 1
        %s308 = smul.addr %s307, 272
        %s309 = scalar_lea.vmem [#allocation9], %s308
        %s310 = smul.u32 17, %s29
        %s311 = smul.u32 17, %s29
        %s312 = smul.u32 17, %s29
        %s313 = smul.u32 17, %s29
        %v314 = vld [vmem:[%s260] sm:$0xff]
        %v315 = vld [vmem:[%s260 + $0x8] sm:$0xff]
        %v316 = vld [vmem:[%s260 + $0x10] sm:$0xff]
        %v317 = vld [vmem:[%s260 + $0x18] sm:$0xff]
        %v318 = vld [vmem:[%s260 + $0x20] sm:$0xff]
        %v319 = vld [vmem:[%s260 + $0x28] sm:$0xff]
        %v320 = vld [vmem:[%s260 + $0x30] sm:$0xff]
        %v321 = vld [vmem:[%s260 + $0x38] sm:$0xff]
        %v322 = vld [vmem:[%s260 + $0x40] sm:$0xff]
        %v323 = vld [vmem:[%s260 + $0x48] sm:$0xff]
        %v324 = vld [vmem:[%s260 + $0x50] sm:$0xff]
        %v325 = vld [vmem:[%s260 + $0x58] sm:$0xff]
        %v326 = vld [vmem:[%s260 + $0x60] sm:$0xff]
        %v327 = vld [vmem:[%s260 + $0x68] sm:$0xff]
        %v328 = vld [vmem:[%s260 + $0x70] sm:$0xff]
        %v329 = vld [vmem:[%s260 + $0x78] sm:$0xff]
        %v330 = vld [vmem:[%s260 + $0x80] sm:$0xff]
        %v331 = vld [vmem:[%s260 + $0x88] sm:$0xff]
        %v332 = vld [vmem:[%s260 + $0x90] sm:$0xff]
        %v333 = vld [vmem:[%s260 + $0x98] sm:$0xff]
        %v334 = vld [vmem:[%s260 + $0xa0] sm:$0xff]
        %v335 = vld [vmem:[%s260 + $0xa8] sm:$0xff]
        %v336 = vld [vmem:[%s260 + $0xb0] sm:$0xff]
        %v337 = vld [vmem:[%s260 + $0xb8] sm:$0xff]
        %v338 = vld [vmem:[%s260 + $0xc0] sm:$0xff]
        %v339 = vld [vmem:[%s260 + $0xc8] sm:$0xff]
        %v340 = vld [vmem:[%s260 + $0xd0] sm:$0xff]
        %v341 = vld [vmem:[%s260 + $0xd8] sm:$0xff]
        %v342 = vld [vmem:[%s260 + $0xe0] sm:$0xff]
        %v343 = vld [vmem:[%s260 + $0xe8] sm:$0xff]
        %v344 = vld [vmem:[%s260 + $0xf0] sm:$0xff]
        %v345 = vld [vmem:[%s260 + $0xf8] sm:$0xff]
        %v346 = vld [vmem:[%s260 + $0x100] sm:$0xff]
        %v347 = vld [vmem:[%s260 + $0x108] sm:$0xff]
        %v348 = vld [vmem:[%s269] sm:$0xff]
        %v349 = vld [vmem:[%s269 + $0x8] sm:$0xff]
        %v350 = vld [vmem:[%s269 + $0x10] sm:$0xff]
        %v351 = vld [vmem:[%s269 + $0x18] sm:$0xff]
        %v352 = vld [vmem:[%s269 + $0x20] sm:$0xff]
        %v353 = vld [vmem:[%s269 + $0x28] sm:$0xff]
        %v354 = vld [vmem:[%s269 + $0x30] sm:$0xff]
        %v355 = vld [vmem:[%s269 + $0x38] sm:$0xff]
        %v356 = vld [vmem:[%s269 + $0x40] sm:$0xff]
        %v357 = vld [vmem:[%s269 + $0x48] sm:$0xff]
        %v358 = vld [vmem:[%s269 + $0x50] sm:$0xff]
        %v359 = vld [vmem:[%s269 + $0x58] sm:$0xff]
        %v360 = vld [vmem:[%s269 + $0x60] sm:$0xff]
        %v361 = vld [vmem:[%s269 + $0x68] sm:$0xff]
        %v362 = vld [vmem:[%s269 + $0x70] sm:$0xff]
        %v363 = vld [vmem:[%s269 + $0x78] sm:$0xff]
        %v364 = vld [vmem:[%s269 + $0x80] sm:$0xff]
        %v365 = vld [vmem:[%s269 + $0x88] sm:$0xff]
        %v366 = vld [vmem:[%s269 + $0x90] sm:$0xff]
        %v367 = vld [vmem:[%s269 + $0x98] sm:$0xff]
        %v368 = vld [vmem:[%s269 + $0xa0] sm:$0xff]
        %v369 = vld [vmem:[%s269 + $0xa8] sm:$0xff]
        %v370 = vld [vmem:[%s269 + $0xb0] sm:$0xff]
        %v371 = vld [vmem:[%s269 + $0xb8] sm:$0xff]
        %v372 = vld [vmem:[%s269 + $0xc0] sm:$0xff]
        %v373 = vld [vmem:[%s269 + $0xc8] sm:$0xff]
        %v374 = vld [vmem:[%s269 + $0xd0] sm:$0xff]
        %v375 = vld [vmem:[%s269 + $0xd8] sm:$0xff]
        %v376 = vld [vmem:[%s269 + $0xe0] sm:$0xff]
        %v377 = vld [vmem:[%s269 + $0xe8] sm:$0xff]
        %v378 = vld [vmem:[%s269 + $0xf0] sm:$0xff]
        %v379 = vld [vmem:[%s269 + $0xf8] sm:$0xff]
        %v380 = vld [vmem:[%s269 + $0x100] sm:$0xff]
        %v381 = vld [vmem:[%s269 + $0x108] sm:$0xff]
        %v382 = vadd.f32 %v314, %v348
        %v383 = vadd.f32 %v315, %v349
        %v384 = vadd.f32 %v316, %v350
        %v385 = vadd.f32 %v317, %v351
        %v386 = vadd.f32 %v318, %v352
        %v387 = vadd.f32 %v319, %v353
        %v388 = vadd.f32 %v320, %v354
        %v389 = vadd.f32 %v321, %v355
        %v390 = vadd.f32 %v322, %v356
        %v391 = vadd.f32 %v323, %v357
        %v392 = vadd.f32 %v324, %v358
        %v393 = vadd.f32 %v325, %v359
        %v394 = vadd.f32 %v326, %v360
        %v395 = vadd.f32 %v327, %v361
        %v396 = vadd.f32 %v328, %v362
        %v397 = vadd.f32 %v329, %v363
        %v398 = vadd.f32 %v330, %v364
        %v399 = vadd.f32 %v331, %v365
        %v400 = vadd.f32 %v332, %v366
        %v401 = vadd.f32 %v333, %v367
        %v402 = vadd.f32 %v334, %v368
        %v403 = vadd.f32 %v335, %v369
        %v404 = vadd.f32 %v336, %v370
        %v405 = vadd.f32 %v337, %v371
        %v406 = vadd.f32 %v338, %v372
        %v407 = vadd.f32 %v339, %v373
        %v408 = vadd.f32 %v340, %v374
        %v409 = vadd.f32 %v341, %v375
        %v410 = vadd.f32 %v342, %v376
        %v411 = vadd.f32 %v343, %v377
        %v412 = vadd.f32 %v344, %v378
        %v413 = vadd.f32 %v345, %v379
        %v414 = vadd.f32 %v346, %v380
        %v415 = vadd.f32 %v347, %v381
        %416 = vst [vmem:[%s309] sm:$0xff] %v382
        %417 = vst [vmem:[%s309 + $0x8] sm:$0xff] %v383
        %418 = vst [vmem:[%s309 + $0x10] sm:$0xff] %v384
        %419 = vst [vmem:[%s309 + $0x18] sm:$0xff] %v385
        %420 = vst [vmem:[%s309 + $0x20] sm:$0xff] %v386
        %421 = vst [vmem:[%s309 + $0x28] sm:$0xff] %v387
        %422 = vst [vmem:[%s309 + $0x30] sm:$0xff] %v388
        %423 = vst [vmem:[%s309 + $0x38] sm:$0xff] %v389
        %424 = vst [vmem:[%s309 + $0x40] sm:$0xff] %v390
        %425 = vst [vmem:[%s309 + $0x48] sm:$0xff] %v391
        %426 = vst [vmem:[%s309 + $0x50] sm:$0xff] %v392
        %427 = vst [vmem:[%s309 + $0x58] sm:$0xff] %v393
        %428 = vst [vmem:[%s309 + $0x60] sm:$0xff] %v394
        %429 = vst [vmem:[%s309 + $0x68] sm:$0xff] %v395
        %430 = vst [vmem:[%s309 + $0x70] sm:$0xff] %v396
        %431 = vst [vmem:[%s309 + $0x78] sm:$0xff] %v397
        %432 = vst [vmem:[%s309 + $0x80] sm:$0xff] %v398
        %433 = vst [vmem:[%s309 + $0x88] sm:$0xff] %v399
        %434 = vst [vmem:[%s309 + $0x90] sm:$0xff] %v400
        %435 = vst [vmem:[%s309 + $0x98] sm:$0xff] %v401
        %436 = vst [vmem:[%s309 + $0xa0] sm:$0xff] %v402
        %437 = vst [vmem:[%s309 + $0xa8] sm:$0xff] %v403
        %438 = vst [vmem:[%s309 + $0xb0] sm:$0xff] %v404
        %439 = vst [vmem:[%s309 + $0xb8] sm:$0xff] %v405
        %440 = vst [vmem:[%s309 + $0xc0] sm:$0xff] %v406
        %441 = vst [vmem:[%s309 + $0xc8] sm:$0xff] %v407
        %442 = vst [vmem:[%s309 + $0xd0] sm:$0xff] %v408
        %443 = vst [vmem:[%s309 + $0xd8] sm:$0xff] %v409
        %444 = vst [vmem:[%s309 + $0xe0] sm:$0xff] %v410
        %445 = vst [vmem:[%s309 + $0xe8] sm:$0xff] %v411
        %446 = vst [vmem:[%s309 + $0xf0] sm:$0xff] %v412
        %447 = vst [vmem:[%s309 + $0xf8] sm:$0xff] %v413
        %448 = vst [vmem:[%s309 + $0x100] sm:$0xff] %v414
        %449 = vst [vmem:[%s309 + $0x108] sm:$0xff] %v415
        %v450 = vadd.f32 %v382, %v383
        %451 = vadd.xlane.f32.xlu0 %v450
        %v452 = vpop.xlane.xlu0 %451
        %v453 = vadd.f32 %v384, %v385
        %454 = vadd.xlane.f32.xlu0 %v453
        %v455 = vpop.xlane.xlu0 %454
        %v456 = vadd.f32 %v386, %v387
        %457 = vadd.xlane.f32.xlu0 %v456
        %v458 = vpop.xlane.xlu0 %457
        %v459 = vadd.f32 %v388, %v389
        %460 = vadd.xlane.f32.xlu0 %v459
        %v461 = vpop.xlane.xlu0 %460
        %v462 = vadd.f32 %v390, %v391
        %463 = vadd.xlane.f32.xlu0 %v462
        %v464 = vpop.xlane.xlu0 %463
        %v465 = vadd.f32 %v392, %v393
        %466 = vadd.xlane.f32.xlu0 %v465
        %v467 = vpop.xlane.xlu0 %466
        %v468 = vadd.f32 %v394, %v395
        %469 = vadd.xlane.f32.xlu0 %v468
        %v470 = vpop.xlane.xlu0 %469
        %v471 = vadd.f32 %v396, %v397
        %472 = vadd.xlane.f32.xlu0 %v471
        %v473 = vpop.xlane.xlu0 %472
        %v474 = vadd.f32 %v398, %v399
        %475 = vadd.xlane.f32.xlu0 %v474
        %v476 = vpop.xlane.xlu0 %475
        %v477 = vadd.f32 %v400, %v401
        %478 = vadd.xlane.f32.xlu0 %v477
        %v479 = vpop.xlane.xlu0 %478
        %v480 = vadd.f32 %v402, %v403
        %481 = vadd.xlane.f32.xlu0 %v480
        %v482 = vpop.xlane.xlu0 %481
        %v483 = vadd.f32 %v404, %v405
        %484 = vadd.xlane.f32.xlu0 %v483
        %v485 = vpop.xlane.xlu0 %484
        %v486 = vadd.f32 %v406, %v407
        %487 = vadd.xlane.f32.xlu0 %v486
        %v488 = vpop.xlane.xlu0 %487
        %v489 = vadd.f32 %v408, %v409
        %490 = vadd.xlane.f32.xlu0 %v489
        %v491 = vpop.xlane.xlu0 %490
        %v492 = vadd.f32 %v410, %v411
        %493 = vadd.xlane.f32.xlu0 %v492
        %v494 = vpop.xlane.xlu0 %493
        %v495 = vadd.f32 %v412, %v413
        %496 = vadd.xlane.f32.xlu0 %v495
        %v497 = vpop.xlane.xlu0 %496
        %v498 = vadd.f32 %v414, %v415
        %499 = vadd.xlane.f32.xlu0 %v498
        %v500 = vpop.xlane.xlu0 %499
        %v501 = vrcp.pop 256.0
        %v502 = vmul.f32 %v452, %v501
        %v503 = vmul.f32 %v455, %v501
        %v504 = vmul.f32 %v458, %v501
        %v505 = vmul.f32 %v461, %v501
        %v506 = vmul.f32 %v464, %v501
        %v507 = vmul.f32 %v467, %v501
        %v508 = vmul.f32 %v470, %v501
        %v509 = vmul.f32 %v473, %v501
        %v510 = vmul.f32 %v476, %v501
        %v511 = vmul.f32 %v479, %v501
        %v512 = vmul.f32 %v482, %v501
        %v513 = vmul.f32 %v485, %v501
        %v514 = vmul.f32 %v488, %v501
        %v515 = vmul.f32 %v491, %v501
        %v516 = vmul.f32 %v494, %v501
        %v517 = vmul.f32 %v497, %v501
        %v518 = vmul.f32 %v500, %v501
        %v519 = vsub.f32 %v382, %v502
        %v520 = vsub.f32 %v383, %v502
        %v521 = vsub.f32 %v384, %v503
        %v522 = vsub.f32 %v385, %v503
        %v523 = vsub.f32 %v386, %v504
        %v524 = vsub.f32 %v387, %v504
        %v525 = vsub.f32 %v388, %v505
        %v526 = vsub.f32 %v389, %v505
        %v527 = vsub.f32 %v390, %v506
        %v528 = vsub.f32 %v391, %v506
        %v529 = vsub.f32 %v392, %v507
        %v530 = vsub.f32 %v393, %v507
        %v531 = vsub.f32 %v394, %v508
        %v532 = vsub.f32 %v395, %v508
        %v533 = vsub.f32 %v396, %v509
        %v534 = vsub.f32 %v397, %v509
        %v535 = vsub.f32 %v398, %v510
        %v536 = vsub.f32 %v399, %v510
        %v537 = vsub.f32 %v400, %v511
        %v538 = vsub.f32 %v401, %v511
        %v539 = vsub.f32 %v402, %v512
        %v540 = vsub.f32 %v403, %v512
        %v541 = vsub.f32 %v404, %v513
        %v542 = vsub.f32 %v405, %v513
        %v543 = vsub.f32 %v406, %v514
        %v544 = vsub.f32 %v407, %v514
        %v545 = vsub.f32 %v408, %v515
        %v546 = vsub.f32 %v409, %v515
        %v547 = vsub.f32 %v410, %v516
        %v548 = vsub.f32 %v411, %v516
        %v549 = vsub.f32 %v412, %v517
        %v550 = vsub.f32 %v413, %v517
        %v551 = vsub.f32 %v414, %v518
        %v552 = vsub.f32 %v415, %v518
        %v553 = vmul.f32 %v519, %v519
        %v554 = vmul.f32 %v520, %v520
        %v555 = vmul.f32 %v521, %v521
        %v556 = vmul.f32 %v522, %v522
        %v557 = vmul.f32 %v523, %v523
        %v558 = vmul.f32 %v524, %v524
        %v559 = vmul.f32 %v525, %v525
        %v560 = vmul.f32 %v526, %v526
        %v561 = vmul.f32 %v527, %v527
        %v562 = vmul.f32 %v528, %v528
        %v563 = vmul.f32 %v529, %v529
        %v564 = vmul.f32 %v530, %v530
        %v565 = vmul.f32 %v531, %v531
        %v566 = vmul.f32 %v532, %v532
        %v567 = vmul.f32 %v533, %v533
        %v568 = vmul.f32 %v534, %v534
        %v569 = vmul.f32 %v535, %v535
        %v570 = vmul.f32 %v536, %v536
        %v571 = vmul.f32 %v537, %v537
        %v572 = vmul.f32 %v538, %v538
        %v573 = vmul.f32 %v539, %v539
        %v574 = vmul.f32 %v540, %v540
        %v575 = vmul.f32 %v541, %v541
        %v576 = vmul.f32 %v542, %v542
        %v577 = vmul.f32 %v543, %v543
        %v578 = vmul.f32 %v544, %v544
        %v579 = vmul.f32 %v545, %v545
        %v580 = vmul.f32 %v546, %v546
        %v581 = vmul.f32 %v547, %v547
        %v582 = vmul.f32 %v548, %v548
        %v583 = vmul.f32 %v549, %v549
        %v584 = vmul.f32 %v550, %v550
        %v585 = vmul.f32 %v551, %v551
        %v586 = vmul.f32 %v552, %v552
        %v587 = vadd.f32 %v553, %v554
        %588 = vadd.xlane.f32.xlu0 %v587
        %v589 = vpop.xlane.xlu0 %588
        %v590 = vadd.f32 %v555, %v556
        %591 = vadd.xlane.f32.xlu0 %v590
        %v592 = vpop.xlane.xlu0 %591
        %v593 = vadd.f32 %v557, %v558
        %594 = vadd.xlane.f32.xlu0 %v593
        %v595 = vpop.xlane.xlu0 %594
        %v596 = vadd.f32 %v559, %v560
        %597 = vadd.xlane.f32.xlu0 %v596
        %v598 = vpop.xlane.xlu0 %597
        %v599 = vadd.f32 %v561, %v562
        %600 = vadd.xlane.f32.xlu0 %v599
        %v601 = vpop.xlane.xlu0 %600
        %v602 = vadd.f32 %v563, %v564
        %603 = vadd.xlane.f32.xlu0 %v602
        %v604 = vpop.xlane.xlu0 %603
        %v605 = vadd.f32 %v565, %v566
        %606 = vadd.xlane.f32.xlu0 %v605
        %v607 = vpop.xlane.xlu0 %606
        %v608 = vadd.f32 %v567, %v568
        %609 = vadd.xlane.f32.xlu0 %v608
        %v610 = vpop.xlane.xlu0 %609
        %v611 = vadd.f32 %v569, %v570
        %612 = vadd.xlane.f32.xlu0 %v611
        %v613 = vpop.xlane.xlu0 %612
        %v614 = vadd.f32 %v571, %v572
        %615 = vadd.xlane.f32.xlu0 %v614
        %v616 = vpop.xlane.xlu0 %615
        %v617 = vadd.f32 %v573, %v574
        %618 = vadd.xlane.f32.xlu0 %v617
        %v619 = vpop.xlane.xlu0 %618
        %v620 = vadd.f32 %v575, %v576
        %621 = vadd.xlane.f32.xlu0 %v620
        %v622 = vpop.xlane.xlu0 %621
        %v623 = vadd.f32 %v577, %v578
        %624 = vadd.xlane.f32.xlu0 %v623
        %v625 = vpop.xlane.xlu0 %624
        %v626 = vadd.f32 %v579, %v580
        %627 = vadd.xlane.f32.xlu0 %v626
        %v628 = vpop.xlane.xlu0 %627
        %v629 = vadd.f32 %v581, %v582
        %630 = vadd.xlane.f32.xlu0 %v629
        %v631 = vpop.xlane.xlu0 %630
        %v632 = vadd.f32 %v583, %v584
        %633 = vadd.xlane.f32.xlu0 %v632
        %v634 = vpop.xlane.xlu0 %633
        %v635 = vadd.f32 %v585, %v586
        %636 = vadd.xlane.f32.xlu0 %v635
        %v637 = vpop.xlane.xlu0 %636
        %v638 = vmul.f32 %v589, %v501
        %v639 = vmul.f32 %v592, %v501
        %v640 = vmul.f32 %v595, %v501
        %v641 = vmul.f32 %v598, %v501
        %v642 = vmul.f32 %v601, %v501
        %v643 = vmul.f32 %v604, %v501
        %v644 = vmul.f32 %v607, %v501
        %v645 = vmul.f32 %v610, %v501
        %v646 = vmul.f32 %v613, %v501
        %v647 = vmul.f32 %v616, %v501
        %v648 = vmul.f32 %v619, %v501
        %v649 = vmul.f32 %v622, %v501
        %v650 = vmul.f32 %v625, %v501
        %v651 = vmul.f32 %v628, %v501
        %v652 = vmul.f32 %v631, %v501
        %v653 = vmul.f32 %v634, %v501
        %v654 = vmul.f32 %v637, %v501
        %v655 = vadd.f32 %v638, 1e-05
        %v656 = vadd.f32 %v639, 1e-05
        %v657 = vadd.f32 %v640, 1e-05
        %v658 = vadd.f32 %v641, 1e-05
        %v659 = vadd.f32 %v642, 1e-05
        %v660 = vadd.f32 %v643, 1e-05
        %v661 = vadd.f32 %v644, 1e-05
        %v662 = vadd.f32 %v645, 1e-05
        %v663 = vadd.f32 %v646, 1e-05
        %v664 = vadd.f32 %v647, 1e-05
        %v665 = vadd.f32 %v648, 1e-05
        %v666 = vadd.f32 %v649, 1e-05
        %v667 = vadd.f32 %v650, 1e-05
        %v668 = vadd.f32 %v651, 1e-05
        %v669 = vadd.f32 %v652, 1e-05
        %v670 = vadd.f32 %v653, 1e-05
        %v671 = vadd.f32 %v654, 1e-05
        %v672 = vrsqrt.pop %v655
        %v673 = vrsqrt.pop %v656
        %v674 = vrsqrt.pop %v657
        %v675 = vrsqrt.pop %v658
        %v676 = vrsqrt.pop %v659
        %v677 = vrsqrt.pop %v660
        %v678 = vrsqrt.pop %v661
        %v679 = vrsqrt.pop %v662
        %v680 = vrsqrt.pop %v663
        %v681 = vrsqrt.pop %v664
        %v682 = vrsqrt.pop %v665
        %v683 = vrsqrt.pop %v666
        %v684 = vrsqrt.pop %v667
        %v685 = vrsqrt.pop %v668
        %v686 = vrsqrt.pop %v669
        %v687 = vrsqrt.pop %v670
        %v688 = vrsqrt.pop %v671
        %v689 = vmul.f32 %v519, %v672
        %v690 = vmul.f32 %v520, %v672
        %v691 = vmul.f32 %v521, %v673
        %v692 = vmul.f32 %v522, %v673
        %v693 = vmul.f32 %v523, %v674
        %v694 = vmul.f32 %v524, %v674
        %v695 = vmul.f32 %v525, %v675
        %v696 = vmul.f32 %v526, %v675
        %v697 = vmul.f32 %v527, %v676
        %v698 = vmul.f32 %v528, %v676
        %v699 = vmul.f32 %v529, %v677
        %v700 = vmul.f32 %v530, %v677
        %v701 = vmul.f32 %v531, %v678
        %v702 = vmul.f32 %v532, %v678
        %v703 = vmul.f32 %v533, %v679
        %v704 = vmul.f32 %v534, %v679
        %v705 = vmul.f32 %v535, %v680
        %v706 = vmul.f32 %v536, %v680
        %v707 = vmul.f32 %v537, %v681
        %v708 = vmul.f32 %v538, %v681
        %v709 = vmul.f32 %v539, %v682
        %v710 = vmul.f32 %v540, %v682
        %v711 = vmul.f32 %v541, %v683
        %v712 = vmul.f32 %v542, %v683
        %v713 = vmul.f32 %v543, %v684
        %v714 = vmul.f32 %v544, %v684
        %v715 = vmul.f32 %v545, %v685
        %v716 = vmul.f32 %v546, %v685
        %v717 = vmul.f32 %v547, %v686
        %v718 = vmul.f32 %v548, %v686
        %v719 = vmul.f32 %v549, %v687
        %v720 = vmul.f32 %v550, %v687
        %v721 = vmul.f32 %v551, %v688
        %v722 = vmul.f32 %v552, %v688
        %v723 = vpack.c.bf16 %v691, %v689
        %v724 = vpack.c.bf16 %v692, %v690
        %v725 = vpack.c.bf16 %v695, %v693
        %v726 = vpack.c.bf16 %v696, %v694
        %v727 = vpack.c.bf16 %v699, %v697
        %v728 = vpack.c.bf16 %v700, %v698
        %v729 = vpack.c.bf16 %v703, %v701
        %v730 = vpack.c.bf16 %v704, %v702
        %v731 = vpack.c.bf16 %v707, %v705
        %v732 = vpack.c.bf16 %v708, %v706
        %v733 = vpack.c.bf16 %v711, %v709
        %v734 = vpack.c.bf16 %v712, %v710
        %v735 = vpack.c.bf16 %v715, %v713
        %v736 = vpack.c.bf16 %v716, %v714
        %v737 = vpack.c.bf16 %v719, %v717
        %v738 = vpack.c.bf16 %v720, %v718
        %v739 = vpack.c.bf16 %v721, %v721
        %v740 = vpack.c.bf16 %v722, %v722
        %v741 = vld [vmem:[#allocation7] sm:$0xff]
        %v742 = vld [vmem:[#allocation7 + $0x8] sm:$0xff]
        %v743 = vld [vmem:[#allocation7 + $0x10] sm:$0xff]
        %v744 = vld [vmem:[#allocation7 + $0x18] sm:$0xff]
        %v745 = vld [vmem:[#allocation7 + $0x20] sm:$0xff]
        %v746 = vld [vmem:[#allocation7 + $0x28] sm:$0xff]
        %v747 = vld [vmem:[#allocation7 + $0x30] sm:$0xff]
        %v748 = vld [vmem:[#allocation7 + $0x38] sm:$0xff]
        %v749 = vld [vmem:[#allocation7 + $0x40] sm:$0xff]
        %v750 = vld [vmem:[#allocation7 + $0x48] sm:$0xff]
        %v751 = vld [vmem:[#allocation7 + $0x50] sm:$0xff]
        %v752 = vld [vmem:[#allocation7 + $0x58] sm:$0xff]
        %v753 = vld [vmem:[#allocation7 + $0x60] sm:$0xff]
        %v754 = vld [vmem:[#allocation7 + $0x68] sm:$0xff]
        %v755 = vld [vmem:[#allocation7 + $0x70] sm:$0xff]
        %v756 = vld [vmem:[#allocation7 + $0x78] sm:$0xff]
        %v757 = vld [vmem:[#allocation7 + $0x80] sm:$0xff]
        %v758 = vld [vmem:[#allocation7 + $0x88] sm:$0xff]
        %v759 = vld [vmem:[#allocation7 + $0x90] sm:$0xff]
        %v760 = vld [vmem:[#allocation7 + $0x98] sm:$0xff]
        %v761 = vld [vmem:[#allocation7 + $0xa0] sm:$0xff]
        %v762 = vld [vmem:[#allocation7 + $0xa8] sm:$0xff]
        %v763 = vld [vmem:[#allocation7 + $0xb0] sm:$0xff]
        %v764 = vld [vmem:[#allocation7 + $0xb8] sm:$0xff]
        %v765 = vld [vmem:[#allocation7 + $0xc0] sm:$0xff]
        %v766 = vld [vmem:[#allocation7 + $0xc8] sm:$0xff]
        %v767 = vld [vmem:[#allocation7 + $0xd0] sm:$0xff]
        %v768 = vld [vmem:[#allocation7 + $0xd8] sm:$0xff]
        %v769 = vld [vmem:[#allocation7 + $0xe0] sm:$0xff]
        %v770 = vld [vmem:[#allocation7 + $0xe8] sm:$0xff]
        %v771 = vld [vmem:[#allocation7 + $0xf0] sm:$0xff]
        %v772 = vld [vmem:[#allocation7 + $0xf8] sm:$0xff]
        %v773 = vld [vmem:[%s3] sm:$0x3]
        %v775 = vlaneseq
        %v776 = vshrl.u32 %v775, 7
        %v777 = vsub.s32 0, %v776
        %v778 = vrot.slane %v773, %v777
        %v779 = vlaneseq
        %v780 = vshrl.u32 %v779, 7
        %v781 = vsub.s32 1, %v780
        %v782 = vrot.slane %v773, %v781
        %v817 = vunpack.c.l.b16 %v741
        %v818 = vunpack.c.h.b16 %v741
        %v819 = vunpack.c.l.b16 %v742
        %v820 = vunpack.c.h.b16 %v742
        %v821 = vunpack.c.l.b16 %v743
        %v822 = vunpack.c.h.b16 %v743
        %v823 = vunpack.c.l.b16 %v744
        %v824 = vunpack.c.h.b16 %v744
        %v825 = vunpack.c.l.b16 %v745
        %v826 = vunpack.c.h.b16 %v745
        %v827 = vunpack.c.l.b16 %v746
        %v828 = vunpack.c.h.b16 %v746
        %v829 = vunpack.c.l.b16 %v747
        %v830 = vunpack.c.h.b16 %v747
        %v831 = vunpack.c.l.b16 %v748
        %v832 = vunpack.c.h.b16 %v748
        %v833 = vunpack.c.l.b16 %v749
        %v834 = vunpack.c.h.b16 %v749
        %v835 = vunpack.c.l.b16 %v750
        %v836 = vunpack.c.h.b16 %v750
        %v837 = vunpack.c.l.b16 %v751
        %v838 = vunpack.c.h.b16 %v751
        %v839 = vunpack.c.l.b16 %v752
        %v840 = vunpack.c.h.b16 %v752
        %v841 = vunpack.c.l.b16 %v753
        %v842 = vunpack.c.h.b16 %v753
        %v843 = vunpack.c.l.b16 %v754
        %v844 = vunpack.c.h.b16 %v754
        %v845 = vunpack.c.l.b16 %v755
        %v846 = vunpack.c.h.b16 %v755
        %v847 = vunpack.c.l.b16 %v756
        %v848 = vunpack.c.h.b16 %v756
        %v849 = vunpack.c.l.b16 %v757
        %v850 = vunpack.c.h.b16 %v757
        %v851 = vunpack.c.l.b16 %v758
        %v852 = vunpack.c.h.b16 %v758
        %v853 = vunpack.c.l.b16 %v759
        %v854 = vunpack.c.h.b16 %v759
        %v855 = vunpack.c.l.b16 %v760
        %v856 = vunpack.c.h.b16 %v760
        %v857 = vunpack.c.l.b16 %v761
        %v858 = vunpack.c.h.b16 %v761
        %v859 = vunpack.c.l.b16 %v762
        %v860 = vunpack.c.h.b16 %v762
        %v861 = vunpack.c.l.b16 %v763
        %v862 = vunpack.c.h.b16 %v763
        %v863 = vunpack.c.l.b16 %v764
        %v864 = vunpack.c.h.b16 %v764
        %v865 = vunpack.c.l.b16 %v765
        %v866 = vunpack.c.h.b16 %v765
        %v867 = vunpack.c.l.b16 %v766
        %v868 = vunpack.c.h.b16 %v766
        %v869 = vunpack.c.l.b16 %v767
        %v870 = vunpack.c.h.b16 %v767
        %v871 = vunpack.c.l.b16 %v768
        %v872 = vunpack.c.h.b16 %v768
        %v873 = vunpack.c.l.b16 %v769
        %v874 = vunpack.c.h.b16 %v769
        %v875 = vunpack.c.l.b16 %v770
        %v876 = vunpack.c.h.b16 %v770
        %v877 = vunpack.c.l.b16 %v771
        %v878 = vunpack.c.h.b16 %v771
        %v879 = vunpack.c.l.b16 %v772
        %v880 = vunpack.c.h.b16 %v772
        %v881 = vpack.c.b16 %v819, %v817
        %v882 = vpack.c.b16 %v820, %v818
        %v883 = vpack.c.b16 %v823, %v821
        %v884 = vpack.c.b16 %v824, %v822
        %v885 = vpack.c.b16 %v827, %v825
        %v886 = vpack.c.b16 %v828, %v826
        %v887 = vpack.c.b16 %v831, %v829
        %v888 = vpack.c.b16 %v832, %v830
        %v889 = vpack.c.b16 %v835, %v833
        %v890 = vpack.c.b16 %v836, %v834
        %v891 = vpack.c.b16 %v839, %v837
        %v892 = vpack.c.b16 %v840, %v838
        %v893 = vpack.c.b16 %v843, %v841
        %v894 = vpack.c.b16 %v844, %v842
        %v895 = vpack.c.b16 %v847, %v845
        %v896 = vpack.c.b16 %v848, %v846
        %v897 = vpack.c.b16 %v851, %v849
        %v898 = vpack.c.b16 %v852, %v850
        %v899 = vpack.c.b16 %v855, %v853
        %v900 = vpack.c.b16 %v856, %v854
        %v901 = vpack.c.b16 %v859, %v857
        %v902 = vpack.c.b16 %v860, %v858
        %v903 = vpack.c.b16 %v863, %v861
        %v904 = vpack.c.b16 %v864, %v862
        %v905 = vpack.c.b16 %v867, %v865
        %v906 = vpack.c.b16 %v868, %v866
        %v907 = vpack.c.b16 %v871, %v869
        %v908 = vpack.c.b16 %v872, %v870
        %v909 = vpack.c.b16 %v875, %v873
        %v910 = vpack.c.b16 %v876, %v874
        %v911 = vpack.c.b16 %v879, %v877
        %v912 = vpack.c.b16 %v880, %v878
        %945 = vmatprep.subr.bf16.mxu0 %v896
        %946 = vmatpush1.bf16.msra.mxu0 %v895
        %947 = vmatprep.subr.bf16.mxu0 %v894
        %948 = vmatpush1.bf16.msra.mxu0 %v893
        %949 = vmatprep.subr.bf16.mxu0 %v892
        %950 = vmatpush1.bf16.msra.mxu0 %v891
        %951 = vmatprep.subr.bf16.mxu0 %v890
        %952 = vmatpush1.bf16.msra.mxu0 %v889
        %953 = vmatprep.subr.bf16.mxu0 %v888
        %954 = vmatpush1.bf16.msra.mxu0 %v887
        %955 = vmatprep.subr.bf16.mxu0 %v886
        %956 = vmatpush1.bf16.msra.mxu0 %v885
        %957 = vmatprep.subr.bf16.mxu0 %v884
        %958 = vmatpush1.bf16.msra.mxu0 %v883
        %959 = vmatprep.subr.bf16.mxu0 %v882
        %960 = vmatpush1.bf16.msra.mxu0 %v881
        %961 = vmatprep.subr.bf16.mxu0 %v912
        %962 = vmatpush2.bf16.msra.mxu0 %v911
        %963 = vmatprep.subr.bf16.mxu0 %v910
        %964 = vmatpush2.bf16.msra.mxu0 %v909
        %965 = vmatprep.subr.bf16.mxu0 %v908
        %966 = vmatpush2.bf16.msra.mxu0 %v907
        %967 = vmatprep.subr.bf16.mxu0 %v906
        %968 = vmatpush2.bf16.msra.mxu0 %v905
        %969 = vmatprep.subr.bf16.mxu0 %v904
        %970 = vmatpush2.bf16.msra.mxu0 %v903
        %971 = vmatprep.subr.bf16.mxu0 %v902
        %972 = vmatpush2.bf16.msra.mxu0 %v901
        %973 = vmatprep.subr.bf16.mxu0 %v900
        %974 = vmatpush2.bf16.msra.mxu0 %v899
        %975 = vmatprep.subr.bf16.mxu0 %v898
        %976 = vmatpush2.bf16.msra.mxu0 %v897
        %977 = vmatprep.mubr.bf16.mxu0 %v724
        %978 = vmatmul.mubr.bf16.gmra.mxu0 %v723
        %v979 = vpop.f32.mrf.mxu0
        %v980 = vadd.f32 %v778, %v979
        %v981 = vpop.f32.mrf.mxu0
        %v982 = vadd.f32 %v782, %v981
        %v983 = vpop.f32.mrf.mxu0
        %v984 = vadd.f32 %v778, %v983
        %v985 = vpop.f32.mrf.mxu0
        %v986 = vadd.f32 %v782, %v985
        %987 = vmatprep.mubr.bf16.mxu0 %v726
        %988 = vmatmul.mubr.bf16.gmra.mxu0 %v725
        %v989 = vpop.f32.mrf.mxu0
        %v990 = vadd.f32 %v778, %v989
        %v991 = vpop.f32.mrf.mxu0
        %v992 = vadd.f32 %v782, %v991
        %v993 = vpop.f32.mrf.mxu0
        %v994 = vadd.f32 %v778, %v993
        %v995 = vpop.f32.mrf.mxu0
        %v996 = vadd.f32 %v782, %v995
        %997 = vmatprep.mubr.bf16.mxu0 %v728
        %998 = vmatmul.mubr.bf16.gmra.mxu0 %v727
        %v999 = vpop.f32.mrf.mxu0
        %v1000 = vadd.f32 %v778, %v999
        %v1001 = vpop.f32.mrf.mxu0
        %v1002 = vadd.f32 %v782, %v1001
        %v1003 = vpop.f32.mrf.mxu0
        %v1004 = vadd.f32 %v778, %v1003
        %v1005 = vpop.f32.mrf.mxu0
        %v1006 = vadd.f32 %v782, %v1005
        %1007 = vmatprep.mubr.bf16.mxu0 %v730
        %1008 = vmatmul.mubr.bf16.gmra.mxu0 %v729
        %v1009 = vpop.f32.mrf.mxu0
        %v1010 = vadd.f32 %v778, %v1009
        %v1011 = vpop.f32.mrf.mxu0
        %v1012 = vadd.f32 %v782, %v1011
        %v1013 = vpop.f32.mrf.mxu0
        %v1014 = vadd.f32 %v778, %v1013
        %v1015 = vpop.f32.mrf.mxu0
        %v1016 = vadd.f32 %v782, %v1015
        %1017 = vmatprep.mubr.bf16.mxu0 %v732
        %1018 = vmatmul.mubr.bf16.gmra.mxu0 %v731
        %v1019 = vpop.f32.mrf.mxu0
        %v1020 = vadd.f32 %v778, %v1019
        %v1021 = vpop.f32.mrf.mxu0
        %v1022 = vadd.f32 %v782, %v1021
        %v1023 = vpop.f32.mrf.mxu0
        %v1024 = vadd.f32 %v778, %v1023
        %v1025 = vpop.f32.mrf.mxu0
        %v1026 = vadd.f32 %v782, %v1025
        %1027 = vmatprep.mubr.bf16.mxu0 %v734
        %1028 = vmatmul.mubr.bf16.gmra.mxu0 %v733
        %v1029 = vpop.f32.mrf.mxu0
        %v1030 = vadd.f32 %v778, %v1029
        %v1031 = vpop.f32.mrf.mxu0
        %v1032 = vadd.f32 %v782, %v1031
        %v1033 = vpop.f32.mrf.mxu0
        %v1034 = vadd.f32 %v778, %v1033
        %v1035 = vpop.f32.mrf.mxu0
        %v1036 = vadd.f32 %v782, %v1035
        %1037 = vmatprep.mubr.bf16.mxu0 %v736
        %1038 = vmatmul.mubr.bf16.gmra.mxu0 %v735
        %v1039 = vpop.f32.mrf.mxu0
        %v1040 = vadd.f32 %v778, %v1039
        %v1041 = vpop.f32.mrf.mxu0
        %v1042 = vadd.f32 %v782, %v1041
        %v1043 = vpop.f32.mrf.mxu0
        %v1044 = vadd.f32 %v778, %v1043
        %v1045 = vpop.f32.mrf.mxu0
        %v1046 = vadd.f32 %v782, %v1045
        %1047 = vmatprep.mubr.bf16.mxu0 %v738
        %1048 = vmatmul.mubr.bf16.gmra.mxu0 %v737
        %v1049 = vpop.f32.mrf.mxu0
        %v1050 = vadd.f32 %v778, %v1049
        %v1051 = vpop.f32.mrf.mxu0
        %v1052 = vadd.f32 %v782, %v1051
        %v1053 = vpop.f32.mrf.mxu0
        %v1054 = vadd.f32 %v778, %v1053
        %v1055 = vpop.f32.mrf.mxu0
        %v1056 = vadd.f32 %v782, %v1055
        %1057 = vmatprep.mubr.bf16.mxu0 %v740
        %1058 = vmatmul.mubr.bf16.gmra.mxu0 %v739
        %v1059 = vpop.f32.mrf.mxu0
        %v1060 = vadd.f32 %v778, %v1059
        %v1061 = vpop.f32.mrf.mxu0
        %v1062 = vadd.f32 %v782, %v1061
        %v1063 = vpop.f32.mrf.mxu0
        %v1064 = vpop.f32.mrf.mxu0
        %1065 = vdwg.mxu0
        %1066 = vst [vmem:[%s302] sm:$0xff] %v980
        %1067 = vst [vmem:[%s302 + $0x8] sm:$0xff] %v982
        %1068 = vst [vmem:[%s302 + $0x10] sm:$0xff] %v984
        %1069 = vst [vmem:[%s302 + $0x18] sm:$0xff] %v986
        %1070 = vst [vmem:[%s302 + $0x20] sm:$0xff] %v990
        %1071 = vst [vmem:[%s302 + $0x28] sm:$0xff] %v992
        %1072 = vst [vmem:[%s302 + $0x30] sm:$0xff] %v994
        %1073 = vst [vmem:[%s302 + $0x38] sm:$0xff] %v996
        %1074 = vst [vmem:[%s302 + $0x40] sm:$0xff] %v1000
        %1075 = vst [vmem:[%s302 + $0x48] sm:$0xff] %v1002
        %1076 = vst [vmem:[%s302 + $0x50] sm:$0xff] %v1004
        %1077 = vst [vmem:[%s302 + $0x58] sm:$0xff] %v1006
        %1078 = vst [vmem:[%s302 + $0x60] sm:$0xff] %v1010
        %1079 = vst [vmem:[%s302 + $0x68] sm:$0xff] %v1012
        %1080 = vst [vmem:[%s302 + $0x70] sm:$0xff] %v1014
        %1081 = vst [vmem:[%s302 + $0x78] sm:$0xff] %v1016
        %1082 = vst [vmem:[%s302 + $0x80] sm:$0xff] %v1020
        %1083 = vst [vmem:[%s302 + $0x88] sm:$0xff] %v1022
        %1084 = vst [vmem:[%s302 + $0x90] sm:$0xff] %v1024
        %1085 = vst [vmem:[%s302 + $0x98] sm:$0xff] %v1026
        %1086 = vst [vmem:[%s302 + $0xa0] sm:$0xff] %v1030
        %1087 = vst [vmem:[%s302 + $0xa8] sm:$0xff] %v1032
        %1088 = vst [vmem:[%s302 + $0xb0] sm:$0xff] %v1034
        %1089 = vst [vmem:[%s302 + $0xb8] sm:$0xff] %v1036
        %1090 = vst [vmem:[%s302 + $0xc0] sm:$0xff] %v1040
        %1091 = vst [vmem:[%s302 + $0xc8] sm:$0xff] %v1042
        %1092 = vst [vmem:[%s302 + $0xd0] sm:$0xff] %v1044
        %1093 = vst [vmem:[%s302 + $0xd8] sm:$0xff] %v1046
        %1094 = vst [vmem:[%s302 + $0xe0] sm:$0xff] %v1050
        %1095 = vst [vmem:[%s302 + $0xe8] sm:$0xff] %v1052
        %1096 = vst [vmem:[%s302 + $0xf0] sm:$0xff] %v1054
        %1097 = vst [vmem:[%s302 + $0xf8] sm:$0xff] %v1056
        %1098 = vst [vmem:[%s302 + $0x100] sm:$0xff] %v1060
        %1099 = vst [vmem:[%s302 + $0x108] sm:$0xff] %v1062
        %s1100 = sand.u32 %s131, 1
        %s1101 = scalar_lea.sflag [#allocation4], %s1100
        %s1102 = sand.u32 %s131, 1
        %s1103 = smul.addr %s1102, 272
        %s1104 = scalar_lea.vmem [#allocation8], %s1103
        %s1105 = sand.u32 %s157, 1
        %s1106 = scalar_lea.sflag [#allocation10], %s1105
        %s1107 = sand.u32 %s157, 1
        %s1108 = smul.addr %s1107, 272
        %s1109 = scalar_lea.vmem [#allocation9], %s1108
        // Predicated region
        $region49: #{tpu_custom_call.1} parent=35 // pred_check
          %p1110 = pneg %p141
        $region50: #{tpu_custom_call.1} parent=35 // pred_check_branch
          %1112 = sbr.rel (%p1110) target = $region52
        $region51: #{tpu_custom_call.1} parent=35 // pred_region
          %s1113 = smul.u32 17, %s29
          %s1115 = ssub.s32 4352, 4352
          %1116 = vsyncadd %s1101, %s1115
          %s1117 = smul.addr %s1113, 2
          %s1118 = smul.addr %s1117, 128
          %s1119 = scalar_lea.hbm %s4, %s1118
          %s1120 = sshll.u32 %s1104, 4
          %s1121 = int_to_ptr.vmem [resolvable:$true] %s1120
          %1126 = dma.vmem_to_hbm [thread:$0]  %s1121, 4352, %s1119, %s1101, 256, 256, 16
        $region52: #{tpu_custom_call.1} parent=35 // pred_fallthru
          _
        // Predicated region
        $region53: #{tpu_custom_call.1} parent=35 // pred_check
          %p1127 = pneg %p167
        $region54: #{tpu_custom_call.1} parent=35 // pred_check_branch
          %1129 = sbr.rel (%p1127) target = $region56
        $region55: #{tpu_custom_call.1} parent=35 // pred_region
          %s1130 = smul.u32 17, %s29
          %s1132 = ssub.s32 4352, 4352
          %1133 = vsyncadd %s1106, %s1132
          %s1134 = smul.addr %s1130, 2
          %s1135 = smul.addr %s1134, 128
          %s1136 = scalar_lea.hbm %s5, %s1135
          %s1137 = sshll.u32 %s1109, 4
          %s1138 = int_to_ptr.vmem [resolvable:$true] %s1137
          %1143 = dma.vmem_to_hbm [thread:$0]  %s1138, 4352, %s1136, %s1106, 256, 256, 16
        $region56: #{tpu_custom_call.1} parent=35 // pred_fallthru
          _
      $region36: #{tpu_custom_call.1} parent=5 // pred_fallthru
        _
      %p1144 = scmp.le.s32.totalorder 2, %s24
      // Predicated region
      $region57: #{tpu_custom_call.1} parent=5 // pred_check
        %p1145 = pneg %p1144
      $region58: #{tpu_custom_call.1} parent=5 // pred_check_branch
        %1147 = sbr.rel (%p1145) target = $region60
      $region59: #{tpu_custom_call.1} parent=5 // pred_region
        %s1148 = ssub.s32 %s24, 2
        // Predicated region
        $region61: #{tpu_custom_call.1} parent=59 // pred_check
          %p1149 = pneg %p147
        $region62: #{tpu_custom_call.1} parent=59 // pred_check_branch
          %1151 = sbr.rel (%p1149) target = $region64
        $region63: #{tpu_custom_call.1} parent=59 // pred_region
          %s1152 = sand.u32 %s132, 1
          %s1153 = scalar_lea.sflag [#allocation4], %s1152
          %s1154 = sand.u32 %s132, 1
          %s1155 = smul.addr %s1154, 272
          %s1156 = scalar_lea.vmem [#allocation8], %s1155
          %1157 = dma.done %s1153, 4352
        $region64: #{tpu_custom_call.1} parent=59 // pred_fallthru
          _
        // Predicated region
        $region65: #{tpu_custom_call.1} parent=59 // pred_check
          %p1158 = pneg %p173
        $region66: #{tpu_custom_call.1} parent=59 // pred_check_branch
          %1160 = sbr.rel (%p1158) target = $region68
        $region67: #{tpu_custom_call.1} parent=59 // pred_region
          %s1161 = sand.u32 %s158, 1
          %s1162 = scalar_lea.sflag [#allocation10], %s1161
          %s1163 = sand.u32 %s158, 1
          %s1164 = smul.addr %s1163, 272
          %s1165 = scalar_lea.vmem [#allocation9], %s1164
          %1166 = dma.done %s1162, 4352
        $region68: #{tpu_custom_call.1} parent=59 // pred_fallthru
          _
      $region60: #{tpu_custom_call.1} parent=5 // pred_fallthru
        _
    $region6: #{tpu_custom_call.1} parent=1 // loop_footer
      %s28 = sadd.s32 1, %s24
    $region7: #{tpu_custom_call.1} parent=1 // loop_footer_branch
      %23 = sbr.rel target = $region3
    $region8: #{tpu_custom_call.1} parent=1 // loop_exit
      _
    %1167 = vsyncpa [#allocation3], 1
    %s1168 = scalar_lea.sflag [#allocation3], 1
    %1169 = vsyncpa %s1168, 1
    %1170 = vsyncpa [#allocation6], 1
    %s1171 = scalar_lea.sflag [#allocation6], 1
    %1172 = vsyncpa %s1171, 1
    %1173 = vsyncpa [#allocation4], 1
    %s1174 = scalar_lea.sflag [#allocation4], 1
    %1175 = vsyncpa %s1174, 1
    %1176 = vsyncpa [#allocation10], 1
    %s1177 = scalar_lea.sflag [#allocation10], 1
    %1178 = vsyncpa %s1177, 1

</llo_original>
